<compile_context>
chip_gen: v7x
topology: tpu7x:2x2x1
jax: 0.10.0
libtpu: 0.0.40
codegen_flags: <defaults>
</compile_context>

<pallas_src>
import numpy as np
import jax
import jax.numpy as jnp
from jax.experimental import pallas as pl
from jax.experimental.pallas import tpu as pltpu

# ---- "env" configuration (small but consistent with the module) ----
NUM_KIND = 4          # env.num_kind
NUM_VERT = 9          # env.num_vertical
NUM_HORZ = 7          # env.num_horizontal
BATCH = 2

HIN = NUM_VERT - 2                     # rows after dropping last 2 rows
WIN = NUM_HORZ
KSIZE = max(NUM_VERT - 2, NUM_HORZ)    # full_kernel_size
PAD = KSIZE // 2
HOUT = HIN + 2 * PAD - KSIZE + 1
WOUT = WIN + 2 * PAD - KSIZE + 1
S_IN = HIN * WIN                       # 49 board cells
F_OUT = HOUT * WOUT
N_SQ = 200
LIN_IN = F_OUT * NUM_KIND

NUM_BLK = NUM_KIND + 1                 # [each_1..each_K, empty] one-hot blocks
S_PAD = 64                             # lane-padded spatial width (49 -> 64)
FEAT_PAD = NUM_BLK * S_PAD             # 320: folded contraction dim
N_PAD = 256                            # lane-padded hidden dim (200 -> 256)
OUT_PAD = 128                          # lane-dense output; column 0 is the scalar

assert S_IN <= S_PAD and N_SQ <= N_PAD

# MXU operand dtype.  f32 keeps the check tight vs the f32 reference; on
# v6e/v7x switch to jnp.bfloat16 (accumulators/biases stay f32; loosen atol).
MXU_DTYPE = jnp.float32


# ------------------------------------------------------------------
# Host-side helpers: dense conv operator + algebraic fold (float64)
# ------------------------------------------------------------------
def conv_to_dense(w, hin, win, pad):
    """Dense (hin*win, hout*wout) matrix equivalent to a 1->1 channel conv2d
    (cross-correlation, zero padding `pad`, stride 1): conv(x) == x_flat @ M."""
    k = w.shape[0]
    hout = hin + 2 * pad - k + 1
    wout = win + 2 * pad - k + 1
    m = np.zeros((hin * win, hout * wout), np.float64)
    for yo in range(hout):
        for xo in range(wout):
            for a in range(k):
                for b in range(k):
                    yi = yo + a - pad
                    xi = xo + b - pad
                    if 0 <= yi < hin and 0 <= xi < win:
                        m[yi * win + xi, yo * wout + xo] = float(w[a, b])
    return m


def init_params(key):
    std = 0.12
    ks = jax.random.split(key, 12)
    raw = {
        "w_each": jax.random.normal(ks[0], (KSIZE, KSIZE), jnp.float32) * std,
        "b_each": jax.random.normal(ks[1], (), jnp.float32) * std,
        "w_not":  jax.random.normal(ks[2], (KSIZE, KSIZE), jnp.float32) * std,
        "b_not":  jax.random.normal(ks[3], (), jnp.float32) * std,
        "w_emp":  jax.random.normal(ks[4], (KSIZE, KSIZE), jnp.float32) * std,
        "b_emp":  jax.random.normal(ks[5], (), jnp.float32) * std,
        "W1": jax.random.normal(ks[6], (N_SQ, LIN_IN), jnp.float32) * std,
        "b1": jax.random.normal(ks[7], (N_SQ,), jnp.float32) * std,
        "W2": jax.random.normal(ks[8], (N_SQ, N_SQ), jnp.float32) * std,
        "b2": jax.random.normal(ks[9], (N_SQ,), jnp.float32) * std,
        "W3": jax.random.normal(ks[10], (1, N_SQ), jnp.float32) * std,
        "b3": jax.random.normal(ks[11], (1,), jnp.float32) * std,
    }

    # dense conv operators (float64 host precompute)
    A = conv_to_dense(np.asarray(raw["w_each"], np.float64), HIN, WIN, PAD)
    Z = conv_to_dense(np.asarray(raw["w_emp"], np.float64), HIN, WIN, PAD)
    Nc = conv_to_dense(np.asarray(raw["w_not"], np.float64), HIN, WIN, PAD)
    bconv = float(raw["b_each"]) + float(raw["b_emp"]) - float(raw["b_not"])

    # PyTorch flattening interleaves kind fastest: col = (y*WOUT + x)*NUM_KIND + k.
    W1 = np.asarray(raw["W1"], np.float64)
    W1s = [W1[:, k::NUM_KIND].T for k in range(NUM_KIND)]        # (F_OUT, N_SQ)
    Wsum = np.sum(np.stack(W1s, 0), axis=0)

    # Fold: c_k = each_k@(A+N) + empty@(Z+N) - ones@N + bconv  (not_each eliminated)
    #       h1  = sum_blk onehot_blk @ Wf_blk + b1_fold
    blocks = [(A + Nc) @ W1s[k] for k in range(NUM_KIND)] + [(Z + Nc) @ Wsum]
    b1_fold = (np.asarray(raw["b1"], np.float64)[None, :]
               + bconv * (np.ones((1, F_OUT)) @ Wsum)
               - (np.ones((1, S_IN)) @ Nc) @ Wsum)               # (1, N_SQ)

    # Kind-major, 64-row-aligned front operator.  Rows >= S_IN in each block
    # are zero, so padded board lanes (value -1, never matching) and any stray
    # matches there contribute nothing.
    Wf = np.zeros((FEAT_PAD, N_PAD), np.float64)
    for b, blk in enumerate(blocks):
        Wf[b * S_PAD: b * S_PAD + S_IN, :N_SQ] = blk
    b1 = np.zeros((1, N_PAD), np.float64);        b1[0, :N_SQ] = b1_fold[0]
    W2 = np.zeros((N_PAD, N_PAD), np.float64)
    W2[:N_SQ, :N_SQ] = np.asarray(raw["W2"], np.float64).T
    b2 = np.zeros((1, N_PAD), np.float64);        b2[0, :N_SQ] = np.asarray(raw["b2"], np.float64)
    W3 = np.zeros((N_PAD, OUT_PAD), np.float64);  W3[:N_SQ, 0] = np.asarray(raw["W3"], np.float64)[0]
    b3 = np.zeros((1, OUT_PAD), np.float64);      b3[0, 0] = float(raw["b3"][0])

    params = {
        "Wf": jnp.asarray(Wf, MXU_DTYPE),
        "b1": jnp.asarray(b1, jnp.float32),
        "W2": jnp.asarray(W2, MXU_DTYPE),
        "b2": jnp.asarray(b2, jnp.float32),
        "W3": jnp.asarray(W3, MXU_DTYPE),
        "b3": jnp.asarray(b3, jnp.float32),
    }
    return raw, params


# ------------------------------------------------------------------
# Fused Pallas kernel: in-kernel one-hot encode -> 3 lane-dense MXU matmuls
# ------------------------------------------------------------------
def nn_kernel(x_ref, wf_ref, b1_ref, w2_ref, b2_ref, w3_ref, b3_ref, out_ref):
    # board arrives as int8 (64 B/row DMA); widen once for the compares
    xi = x_ref[...].astype(jnp.int32)                             # (TB, S_PAD)

    # folded front layer: one one-hot block per (kind | empty), accumulated
    # directly into the f32 hidden activation (b1 already holds all constants)
    h1 = b1_ref[...]                                              # (1, N_PAD) -> broadcasts
    for blk in range(NUM_BLK):
        val = 0 if blk == NUM_KIND else blk + 1                   # blocks 0..K-1: kind, last: empty
        onehot = (xi == val).astype(MXU_DTYPE)                    # (TB, S_PAD)
        h1 = h1 + jnp.dot(onehot, wf_ref[pl.ds(blk * S_PAD, S_PAD), :],
                          preferred_element_type=jnp.float32)
    h1 = jnp.maximum(h1, 0.2 * h1)                                # leaky_relu(0.2)

    h2 = jnp.dot(h1.astype(MXU_DTYPE), w2_ref[...],
                 preferred_element_type=jnp.float32) + b2_ref[...]
    h2 = jnp.maximum(h2, 0.2 * h2)

    # lane-dense (TB, 128) output; only column 0 is meaningful (rest are zeros)
    out_ref[...] = (jnp.dot(h2.astype(MXU_DTYPE), w3_ref[...],
                            preferred_element_type=jnp.float32) + b3_ref[...])


def _ceil_to(n, m):
    return ((n + m - 1) // m) * m


@jax.jit
def forward(dots_kind_matrix_3D, params):
    # glue: drop last 2 rows, move batch first, flatten spatial row-major
    x = dots_kind_matrix_3D[:-2, :, :]                            # (HIN, WIN, B)
    x = jnp.transpose(x, (2, 0, 1)).reshape(-1, S_IN)             # (B, S_IN)
    B = x.shape[0]

    # batch tiling: int8 sublane-tile (32) aligned; <=1024 rows per grid step;
    # keep >=2 grid steps when the batch is large so v7x megacore splits it.
    B_al = _ceil_to(max(B, 1), 32)
    if B_al >= 512:
        TB = min(1024, _ceil_to((B_al + 1) // 2, 32))
    else:
        TB = B_al
    B_pad = _ceil_to(B_al, TB)

    # raw board only (no host-side slab replication); pad value -1 never
    # matches any one-hot target, and Wf's padded rows are zero anyway.
    x = x.astype(jnp.int8)
    x = jnp.pad(x, ((0, B_pad - B), (0, S_PAD - S_IN)), constant_values=-1)

    row_spec = lambda i: (i, 0)   # batch-tiled
    rep_spec = lambda i: (0, 0)   # weights resident in VMEM across grid steps

    out = pl.pallas_call(
        nn_kernel,
        out_shape=jax.ShapeDtypeStruct((B_pad, OUT_PAD), jnp.float32),
        grid=(B_pad // TB,),
        in_specs=[
            pl.BlockSpec((TB, S_PAD), row_spec),          # int8 board tile
            pl.BlockSpec((FEAT_PAD, N_PAD), rep_spec),    # folded front operator
            pl.BlockSpec((1, N_PAD), rep_spec),           # folded b1
            pl.BlockSpec((N_PAD, N_PAD), rep_spec),       # W2
            pl.BlockSpec((1, N_PAD), rep_spec),           # b2
            pl.BlockSpec((N_PAD, OUT_PAD), rep_spec),     # W3 (padded to 128 cols)
            pl.BlockSpec((1, OUT_PAD), rep_spec),         # b3
        ],
        out_specs=pl.BlockSpec((TB, OUT_PAD), row_spec),
        compiler_params=pltpu.CompilerParams(
            dimension_semantics=("parallel",)),           # megacore split on v7x
    )(x, params["Wf"], params["b1"], params["W2"], params["b2"],
      params["W3"], params["b3"])

    return out[:B, :1]                                    # real scalar is column 0


# ------------------------------------------------------------------
# Pure-JAX reference mirroring the PyTorch forward exactly
# ------------------------------------------------------------------
def _conv2d(x, w):
    return jax.lax.conv_general_dilated(
        x, w[None, None, :, :], window_strides=(1, 1),
        padding=[(PAD, PAD), (PAD, PAD)],
        dimension_numbers=("NCHW", "OIHW", "NCHW"))


def reference_forward(dots_kind_matrix_3D, raw):
    x = dots_kind_matrix_3D[:-2, :, :]
    x = jnp.transpose(x, (2, 0, 1))[:, None, :, :].astype(jnp.float32)  # (B,1,HIN,WIN)
    feats = []
    for k in range(NUM_KIND):
        each = (x == float(k + 1)).astype(jnp.float32)
        empty = (x == 0.0).astype(jnp.float32)
        not_each = jnp.logical_not(each + empty > 0).astype(jnp.float32)
        c = (_conv2d(each, raw["w_each"]) + raw["b_each"]
             + _conv2d(empty, raw["w_emp"]) + raw["b_emp"]
             - (_conv2d(not_each, raw["w_not"]) + raw["b_not"]))
        feats.append(c[..., None])
    cm = jnp.concatenate(feats, axis=4)                  # (B,1,HOUT,WOUT,K)
    lin = cm.reshape(cm.shape[0], -1)
    h = lin @ raw["W1"].T + raw["b1"]
    h = jnp.where(h >= 0, h, 0.2 * h)
    h = h @ raw["W2"].T + raw["b2"]
    h = jnp.where(h >= 0, h, 0.2 * h)
    return h @ raw["W3"].T + raw["b3"]


if __name__ == "__main__":
    key = jax.random.PRNGKey(0)
    pkey, dkey = jax.random.split(key)
    raw, params = init_params(pkey)

    # board values in {0, 1, ..., NUM_KIND}, shape (num_vertical, num_horizontal, batch)
    dots = jax.random.randint(dkey, (NUM_VERT, NUM_HORZ, BATCH), 0, NUM_KIND + 1)

    out = forward(dots, params)
    out = jax.block_until_ready(out)
    assert out.shape == (BATCH, 1)

    ref = reference_forward(dots, raw)
    tol = 2e-3 if MXU_DTYPE == jnp.float32 else 5e-2
    if not jnp.allclose(out, ref, atol=tol, rtol=tol):
        raise AssertionError(f"mismatch: pallas={out} ref={ref}")
    print("KERNEL_OK")
</pallas_src>

<mosaic_0001>
module attributes {stable_mosaic.version = 11 : i64} {
  func.func @nn_kernel(%arg0: i32, %arg1: memref<32x64xi8, #tpu.memory_space<vmem>>, %arg2: memref<320x256xf32, #tpu.memory_space<vmem>>, %arg3: memref<1x256xf32, #tpu.memory_space<vmem>>, %arg4: memref<256x256xf32, #tpu.memory_space<vmem>>, %arg5: memref<1x256xf32, #tpu.memory_space<vmem>>, %arg6: memref<256x128xf32, #tpu.memory_space<vmem>>, %arg7: memref<1x128xf32, #tpu.memory_space<vmem>>, %arg8: memref<32x128xf32, #tpu.memory_space<vmem>>) attributes {dimension_semantics = [#tpu.dimension_semantics<parallel>], iteration_bounds = array<i64: 1>, scalar_prefetch = 0 : i64, scratch_operands = 0 : i64, tpu.core_type = #tpu.core_type<tc>, window_params = [{transform_indices = @transform_0, window_bounds = array<i64: 32, 64>}, {pipeline_mode = #tpu.pipeline_mode<synchronous>, transform_indices = @transform_1, window_bounds = array<i64: 320, 256>}, {pipeline_mode = #tpu.pipeline_mode<synchronous>, transform_indices = @transform_2, window_bounds = array<i64: 1, 256>}, {pipeline_mode = #tpu.pipeline_mode<synchronous>, transform_indices = @transform_3, window_bounds = array<i64: 256, 256>}, {pipeline_mode = #tpu.pipeline_mode<synchronous>, transform_indices = @transform_4, window_bounds = array<i64: 1, 256>}, {pipeline_mode = #tpu.pipeline_mode<synchronous>, transform_indices = @transform_5, window_bounds = array<i64: 256, 128>}, {pipeline_mode = #tpu.pipeline_mode<synchronous>, transform_indices = @transform_6, window_bounds = array<i64: 1, 128>}, {transform_indices = @transform_7, window_bounds = array<i64: 32, 128>}]} {
    %c0 = arith.constant 0 : index
    %c0_0 = arith.constant 0 : index
    %0 = vector.load %arg1[%c0, %c0_0] : memref<32x64xi8, #tpu.memory_space<vmem>>, vector<32x64xi8>
    %1 = arith.extsi %0 : vector<32x64xi8> to vector<32x64xi32>
    %c0_1 = arith.constant 0 : index
    %c0_2 = arith.constant 0 : index
    %2 = vector.load %arg3[%c0_1, %c0_2] : memref<1x256xf32, #tpu.memory_space<vmem>>, vector<1x256xf32>
    %c1_i32 = arith.constant 1 : i32
    %3 = vector.broadcast %c1_i32 : i32 to vector<32x64xi32>
    %4 = arith.cmpi eq, %1, %3 : vector<32x64xi32>
    %5 = arith.extui %4 : vector<32x64xi1> to vector<32x64xi32>
    %6 = arith.sitofp %5 : vector<32x64xi32> to vector<32x64xf32>
    %c0_3 = arith.constant 0 : index
    %c0_4 = arith.constant 0 : index
    %7 = vector.load %arg2[%c0_3, %c0_4] : memref<320x256xf32, #tpu.memory_space<vmem>>, vector<64x256xf32>
    %cst = arith.constant dense<0.000000e+00> : vector<32x256xf32>
    %8 = tpu.matmul %6, %7, %cst {dimension_numbers = #tpu.dot_dimension_numbers<[1], [0], [0], [1], [0, 0, 1, 1], [], []>} : vector<32x64xf32>, vector<64x256xf32>, vector<32x256xf32> -> vector<32x256xf32>
    %9 = vector.broadcast %2 : vector<1x256xf32> to vector<32x256xf32>
    %10 = arith.addf %9, %8 : vector<32x256xf32>
    %c2_i32 = arith.constant 2 : i32
    %11 = vector.broadcast %c2_i32 : i32 to vector<32x64xi32>
    %12 = arith.cmpi eq, %1, %11 : vector<32x64xi32>
    %13 = arith.extui %12 : vector<32x64xi1> to vector<32x64xi32>
    %14 = arith.sitofp %13 : vector<32x64xi32> to vector<32x64xf32>
    %c64 = arith.constant 64 : index
    %c0_5 = arith.constant 0 : index
    %15 = vector.load %arg2[%c64, %c0_5] : memref<320x256xf32, #tpu.memory_space<vmem>>, vector<64x256xf32>
    %cst_6 = arith.constant dense<0.000000e+00> : vector<32x256xf32>
    %16 = tpu.matmul %14, %15, %cst_6 {dimension_numbers = #tpu.dot_dimension_numbers<[1], [0], [0], [1], [0, 0, 1, 1], [], []>} : vector<32x64xf32>, vector<64x256xf32>, vector<32x256xf32> -> vector<32x256xf32>
    %17 = arith.addf %10, %16 : vector<32x256xf32>
    %c3_i32 = arith.constant 3 : i32
    %18 = vector.broadcast %c3_i32 : i32 to vector<32x64xi32>
    %19 = arith.cmpi eq, %1, %18 : vector<32x64xi32>
    %20 = arith.extui %19 : vector<32x64xi1> to vector<32x64xi32>
    %21 = arith.sitofp %20 : vector<32x64xi32> to vector<32x64xf32>
    %c128 = arith.constant 128 : index
    %c0_7 = arith.constant 0 : index
    %22 = vector.load %arg2[%c128, %c0_7] : memref<320x256xf32, #tpu.memory_space<vmem>>, vector<64x256xf32>
    %cst_8 = arith.constant dense<0.000000e+00> : vector<32x256xf32>
    %23 = tpu.matmul %21, %22, %cst_8 {dimension_numbers = #tpu.dot_dimension_numbers<[1], [0], [0], [1], [0, 0, 1, 1], [], []>} : vector<32x64xf32>, vector<64x256xf32>, vector<32x256xf32> -> vector<32x256xf32>
    %24 = arith.addf %17, %23 : vector<32x256xf32>
    %c4_i32 = arith.constant 4 : i32
    %25 = vector.broadcast %c4_i32 : i32 to vector<32x64xi32>
    %26 = arith.cmpi eq, %1, %25 : vector<32x64xi32>
    %27 = arith.extui %26 : vector<32x64xi1> to vector<32x64xi32>
    %28 = arith.sitofp %27 : vector<32x64xi32> to vector<32x64xf32>
    %c192 = arith.constant 192 : index
    %c0_9 = arith.constant 0 : index
    %29 = vector.load %arg2[%c192, %c0_9] : memref<320x256xf32, #tpu.memory_space<vmem>>, vector<64x256xf32>
    %cst_10 = arith.constant dense<0.000000e+00> : vector<32x256xf32>
    %30 = tpu.matmul %28, %29, %cst_10 {dimension_numbers = #tpu.dot_dimension_numbers<[1], [0], [0], [1], [0, 0, 1, 1], [], []>} : vector<32x64xf32>, vector<64x256xf32>, vector<32x256xf32> -> vector<32x256xf32>
    %31 = arith.addf %24, %30 : vector<32x256xf32>
    %c0_i32 = arith.constant 0 : i32
    %32 = vector.broadcast %c0_i32 : i32 to vector<32x64xi32>
    %33 = arith.cmpi eq, %1, %32 : vector<32x64xi32>
    %34 = arith.extui %33 : vector<32x64xi1> to vector<32x64xi32>
    %35 = arith.sitofp %34 : vector<32x64xi32> to vector<32x64xf32>
    %c256 = arith.constant 256 : index
    %c0_11 = arith.constant 0 : index
    %36 = vector.load %arg2[%c256, %c0_11] : memref<320x256xf32, #tpu.memory_space<vmem>>, vector<64x256xf32>
    %cst_12 = arith.constant dense<0.000000e+00> : vector<32x256xf32>
    %37 = tpu.matmul %35, %36, %cst_12 {dimension_numbers = #tpu.dot_dimension_numbers<[1], [0], [0], [1], [0, 0, 1, 1], [], []>} : vector<32x64xf32>, vector<64x256xf32>, vector<32x256xf32> -> vector<32x256xf32>
    %38 = arith.addf %31, %37 : vector<32x256xf32>
    %cst_13 = arith.constant 2.000000e-01 : f32
    %39 = vector.broadcast %cst_13 : f32 to vector<32x256xf32>
    %40 = arith.mulf %39, %38 : vector<32x256xf32>
    %41 = arith.maximumf %38, %40 : vector<32x256xf32>
    %c0_14 = arith.constant 0 : index
    %c0_15 = arith.constant 0 : index
    %42 = vector.load %arg4[%c0_14, %c0_15] : memref<256x256xf32, #tpu.memory_space<vmem>>, vector<256x256xf32>
    %cst_16 = arith.constant dense<0.000000e+00> : vector<32x256xf32>
    %43 = tpu.matmul %41, %42, %cst_16 {dimension_numbers = #tpu.dot_dimension_numbers<[1], [0], [0], [1], [0, 0, 1, 1], [], []>} : vector<32x256xf32>, vector<256x256xf32>, vector<32x256xf32> -> vector<32x256xf32>
    %c0_17 = arith.constant 0 : index
    %c0_18 = arith.constant 0 : index
    %44 = vector.load %arg5[%c0_17, %c0_18] : memref<1x256xf32, #tpu.memory_space<vmem>>, vector<1x256xf32>
    %45 = vector.broadcast %44 : vector<1x256xf32> to vector<32x256xf32>
    %46 = arith.addf %43, %45 : vector<32x256xf32>
    %cst_19 = arith.constant 2.000000e-01 : f32
    %47 = vector.broadcast %cst_19 : f32 to vector<32x256xf32>
    %48 = arith.mulf %47, %46 : vector<32x256xf32>
    %49 = arith.maximumf %46, %48 : vector<32x256xf32>
    %c0_20 = arith.constant 0 : index
    %c0_21 = arith.constant 0 : index
    %50 = vector.load %arg6[%c0_20, %c0_21] : memref<256x128xf32, #tpu.memory_space<vmem>>, vector<256x128xf32>
    %cst_22 = arith.constant dense<0.000000e+00> : vector<32x128xf32>
    %51 = tpu.matmul %49, %50, %cst_22 {dimension_numbers = #tpu.dot_dimension_numbers<[1], [0], [0], [1], [0, 0, 1, 1], [], []>} : vector<32x256xf32>, vector<256x128xf32>, vector<32x128xf32> -> vector<32x128xf32>
    %c0_23 = arith.constant 0 : index
    %c0_24 = arith.constant 0 : index
    %52 = vector.load %arg7[%c0_23, %c0_24] : memref<1x128xf32, #tpu.memory_space<vmem>>, vector<1x128xf32>
    %53 = vector.broadcast %52 : vector<1x128xf32> to vector<32x128xf32>
    %54 = arith.addf %51, %53 : vector<32x128xf32>
    %c0_25 = arith.constant 0 : index
    %c0_26 = arith.constant 0 : index
    %55 = vector.load %arg8[%c0_25, %c0_26] : memref<32x128xf32, #tpu.memory_space<vmem>>, vector<32x128xf32>
    tpu.vector_store %arg8[%c0_25, %c0_26], %54 {strides = array<i32>} : memref<32x128xf32, #tpu.memory_space<vmem>>, vector<32x128xf32>,
    return
  }
  func.func @transform_0(%arg0: i32) -> (i32, i32) {
    %c0_i32 = arith.constant 0 : i32
    %c0_i32_0 = arith.constant 0 : i32
    return %arg0, %c0_i32 : i32, i32
  }
  func.func @transform_1(%arg0: i32) -> (i32, i32) {
    %c0_i32 = arith.constant 0 : i32
    %c0_i32_0 = arith.constant 0 : i32
    %c0_i32_1 = arith.constant 0 : i32
    return %c0_i32, %c0_i32_0 : i32, i32
  }
  func.func @transform_2(%arg0: i32) -> (i32, i32) {
    %c0_i32 = arith.constant 0 : i32
    %c0_i32_0 = arith.constant 0 : i32
    %c0_i32_1 = arith.constant 0 : i32
    return %c0_i32, %c0_i32_0 : i32, i32
  }
  func.func @transform_3(%arg0: i32) -> (i32, i32) {
    %c0_i32 = arith.constant 0 : i32
    %c0_i32_0 = arith.constant 0 : i32
    %c0_i32_1 = arith.constant 0 : i32
    return %c0_i32, %c0_i32_0 : i32, i32
  }
  func.func @transform_4(%arg0: i32) -> (i32, i32) {
    %c0_i32 = arith.constant 0 : i32
    %c0_i32_0 = arith.constant 0 : i32
    %c0_i32_1 = arith.constant 0 : i32
    return %c0_i32, %c0_i32_0 : i32, i32
  }
  func.func @transform_5(%arg0: i32) -> (i32, i32) {
    %c0_i32 = arith.constant 0 : i32
    %c0_i32_0 = arith.constant 0 : i32
    %c0_i32_1 = arith.constant 0 : i32
    return %c0_i32, %c0_i32_0 : i32, i32
  }
  func.func @transform_6(%arg0: i32) -> (i32, i32) {
    %c0_i32 = arith.constant 0 : i32
    %c0_i32_0 = arith.constant 0 : i32
    %c0_i32_1 = arith.constant 0 : i32
    return %c0_i32, %c0_i32_0 : i32, i32
  }
  func.func @transform_7(%arg0: i32) -> (i32, i32) {
    %c0_i32 = arith.constant 0 : i32
    %c0_i32_0 = arith.constant 0 : i32
    return %arg0, %c0_i32 : i32, i32
  }
}

</mosaic_0001>

<llo_original>
// kernel: forward.1
$region0: #{forward.1}
  #allocation0 [shape = 'u32[]', space=smem, size = 0x4, offset = 0x4, fixed_abs, tag = 'smem constant byte address 0x4 - core index']
  #allocation1 [shape = 'u32[144,128]{1,0:T(1,128)}', space=vmem, size = 0x12000, scoped, tag = 'internal scratch']
  %s0 = inlined_call_operand.vmem [shape: s8[32,64], index: 0, kind: input, shape index: {}]
  %s1 = inlined_call_operand.hbm [shape: f32[320,256], index: 1, kind: input, shape index: {}]
  %s2 = inlined_call_operand.vmem [shape: f32[1,256], index: 2, kind: input, shape index: {}]
  %s3 = inlined_call_operand.hbm [shape: f32[256,256], index: 3, kind: input, shape index: {}]
  %s4 = inlined_call_operand.vmem [shape: f32[1,256], index: 4, kind: input, shape index: {}]
  %s5 = inlined_call_operand.hbm [shape: f32[256,128], index: 5, kind: input, shape index: {}]
  %s6 = inlined_call_operand.vmem [shape: f32[1,128], index: 6, kind: input, shape index: {}]
  %s7 = inlined_call_operand.vmem [shape: f32[32,128], index: 7, kind: output, shape index: {}]
  %s8 = sld [smem:[#allocation0]]
  $region50: #{forward.1} parent=0
    _
  %s10 = ssub.s32 1, %s8
  %s11 = scalar_select 0, %s10, %s8
  $region1: #{forward.1} parent=0
    #allocation2 [shape = 'u8[327680]{0}', space=vmem, size = 0x50000, scoped, tag = 'input window, operand 1, single buffered']
    #allocation3 [shape = 's32[1]{0}', space=sflag, size = 0x4, scoped, tag = 'scoped memory for forward.1']
    #allocation4 [shape = 'u8[262144]{0}', space=vmem, size = 0x40000, scoped, tag = 'input window, operand 3, single buffered']
    #allocation5 [shape = 's32[1]{0}', space=sflag, size = 0x4, scoped, tag = 'scoped memory for forward.1']
    #allocation6 [shape = 'u8[131072]{0}', space=vmem, size = 0x20000, scoped, tag = 'input window, operand 5, single buffered']
    %12 = vsyncpa [#allocation3], 0
    %13 = vsyncpa [#allocation5], 0
    // Predicated region
    $region2: #{forward.1} parent=1 // pred_check
      _
    $region3: #{forward.1} parent=1 // pred_check_branch
      %15 = sbr.rel (0) target = $region5
    $region4: #{forward.1} parent=1 // pred_region
      _
    $region5: #{forward.1} parent=1 // pred_fallthru
      _
    // Predicated region
    $region6: #{forward.1} parent=1 // pred_check
      _
    $region7: #{forward.1} parent=1 // pred_check_branch
      %17 = sbr.rel (0) target = $region9
    $region8: #{forward.1} parent=1 // pred_region
      %s19 = ssub.s32 10240, 10240
      %20 = vsyncadd [#allocation3], %s19
      %s21 = sshll.u32 [#allocation2], 4
      %s22 = int_to_ptr.vmem [resolvable:$true] %s21
      %27 = dma.hbm_to_vmem [thread:$0]  %s1, 10240, %s22, [#allocation3], 256, 256, 16
    $region9: #{forward.1} parent=1 // pred_fallthru
      _
    // Predicated region
    $region10: #{forward.1} parent=1 // pred_check
      _
    $region11: #{forward.1} parent=1 // pred_check_branch
      %29 = sbr.rel (0) target = $region13
    $region12: #{forward.1} parent=1 // pred_region
      _
    $region13: #{forward.1} parent=1 // pred_fallthru
      _
    // Predicated region
    $region14: #{forward.1} parent=1 // pred_check
      _
    $region15: #{forward.1} parent=1 // pred_check_branch
      %31 = sbr.rel (0) target = $region17
    $region16: #{forward.1} parent=1 // pred_region
      %s33 = ssub.s32 8192, 8192
      %34 = vsyncadd [#allocation5], %s33
      %s35 = sshll.u32 [#allocation4], 4
      %s36 = int_to_ptr.vmem [resolvable:$true] %s35
      %41 = dma.hbm_to_vmem [thread:$0]  %s3, 8192, %s36, [#allocation5], 256, 256, 16
    $region17: #{forward.1} parent=1 // pred_fallthru
      _
    // Predicated region
    $region18: #{forward.1} parent=1 // pred_check
      _
    $region19: #{forward.1} parent=1 // pred_check_branch
      %43 = sbr.rel (0) target = $region21
    $region20: #{forward.1} parent=1 // pred_region
      _
    $region21: #{forward.1} parent=1 // pred_fallthru
      _
    // Predicated region
    $region22: #{forward.1} parent=1 // pred_check
      _
    $region23: #{forward.1} parent=1 // pred_check_branch
      %45 = sbr.rel (0) target = $region25
    $region24: #{forward.1} parent=1 // pred_region
      %s47 = ssub.s32 4096, 4096
      %48 = vsyncadd [#allocation5], %s47
      %s49 = sshll.u32 [#allocation6], 4
      %s50 = int_to_ptr.vmem [resolvable:$true] %s49
      %55 = dma.hbm_to_vmem [thread:$0]  %s5, 4096, %s50, [#allocation5], 128, 128, 8
    $region25: #{forward.1} parent=1 // pred_fallthru
      _
    // Predicated region
    $region26: #{forward.1} parent=1 // pred_check
      _
    $region27: #{forward.1} parent=1 // pred_check_branch
      %57 = sbr.rel (0) target = $region29
    $region28: #{forward.1} parent=1 // pred_region
      _
    $region29: #{forward.1} parent=1 // pred_fallthru
      _
    // Predicated region
    $region30: #{forward.1} parent=1 // pred_check
      _
    $region31: #{forward.1} parent=1 // pred_check_branch
      %59 = sbr.rel (0) target = $region33
    $region32: #{forward.1} parent=1 // pred_region
      %60 = dma.done [#allocation3], 10240
    $region33: #{forward.1} parent=1 // pred_fallthru
      _
    // Predicated region
    $region34: #{forward.1} parent=1 // pred_check
      _
    $region35: #{forward.1} parent=1 // pred_check_branch
      %62 = sbr.rel (0) target = $region37
    $region36: #{forward.1} parent=1 // pred_region
      %63 = dma.done [#allocation5], 8192
    $region37: #{forward.1} parent=1 // pred_fallthru
      _
    // Predicated region
    $region38: #{forward.1} parent=1 // pred_check
      _
    $region39: #{forward.1} parent=1 // pred_check_branch
      %65 = sbr.rel (0) target = $region41
    $region40: #{forward.1} parent=1 // pred_region
      %66 = dma.done [#allocation5], 4096
    $region41: #{forward.1} parent=1 // pred_fallthru
      _
    %v67 = vld [vmem:[%s0] sm:$0xff]
    %v68 = vunpack.c.0.s8 %v67
    %v69 = vunpack.c.1.s8 %v67
    %v70 = vunpack.c.2.s8 %v67
    %v71 = vunpack.c.3.s8 %v67
    %v72 = vld [vmem:[%s2] sm:$0x3]
    %vm73 = vcmp.eq.s32.totalorder %v68, 1
    %vm74 = vcmp.eq.s32.totalorder %v69, 1
    %vm75 = vcmp.eq.s32.totalorder %v70, 1
    %vm76 = vcmp.eq.s32.totalorder %v71, 1
    %v77 = vsel %vm73, 1, 0
    %v78 = vsel %vm74, 1, 0
    %v79 = vsel %vm75, 1, 0
    %v80 = vsel %vm76, 1, 0
    %v81 = vcvt.s32.f32 %v77
    %v82 = vcvt.s32.f32 %v78
    %v83 = vcvt.s32.f32 %v79
    %v84 = vcvt.s32.f32 %v80
    %v85 = vld [vmem:[#allocation2] sm:$0xff]
    %v86 = vld [vmem:[#allocation2 + $0x8] sm:$0xff]
    %v87 = vld [vmem:[#allocation2 + $0x10] sm:$0xff]
    %v88 = vld [vmem:[#allocation2 + $0x18] sm:$0xff]
    %v89 = vld [vmem:[#allocation2 + $0x20] sm:$0xff]
    %v90 = vld [vmem:[#allocation2 + $0x28] sm:$0xff]
    %v91 = vld [vmem:[#allocation2 + $0x30] sm:$0xff]
    %v92 = vld [vmem:[#allocation2 + $0x38] sm:$0xff]
    %v93 = vld [vmem:[#allocation2 + $0x40] sm:$0xff]
    %v94 = vld [vmem:[#allocation2 + $0x48] sm:$0xff]
    %v95 = vld [vmem:[#allocation2 + $0x50] sm:$0xff]
    %v96 = vld [vmem:[#allocation2 + $0x58] sm:$0xff]
    %v97 = vld [vmem:[#allocation2 + $0x60] sm:$0xff]
    %v98 = vld [vmem:[#allocation2 + $0x68] sm:$0xff]
    %v99 = vld [vmem:[#allocation2 + $0x70] sm:$0xff]
    %v100 = vld [vmem:[#allocation2 + $0x78] sm:$0xff]
    %vm101 = vcmask 523264
    %v103 = vsel %vm101, %v81, 0
    %v106 = vsel %vm101, %v82, 0
    %v109 = vsel %vm101, %v83, 0
    %v112 = vsel %vm101, %v84, 0
    %114 = vmatprep.subr.mxu0 %v86
    %115 = vmatpush1.msra.mxu0 %v85
    %116 = vmatprep.subr.mxu0 %v88
    %117 = vmatpush1.msra.mxu0 %v87
    %118 = vmatprep.subr.mxu0 %v90
    %119 = vmatpush1.msra.mxu0 %v89
    %120 = vmatprep.subr.mxu0 %v92
    %121 = vmatpush1.msra.mxu0 %v91
    %122 = vmatprep.subr.mxu0 %v94
    %123 = vmatpush1.msra.mxu0 %v93
    %124 = vmatprep.subr.mxu0 %v96
    %125 = vmatpush1.msra.mxu0 %v95
    %126 = vmatprep.subr.mxu0 %v98
    %127 = vmatpush1.msra.mxu0 %v97
    %128 = vmatprep.subr.mxu0 %v100
    %129 = vmatpush1.msra.mxu0 %v99
    %130 = vmatprep.subr.mxu0 0.0
    %131 = vmatpush1.msra.mxu0 0.0
    %132 = vmatprep.subr.mxu0 0.0
    %133 = vmatpush1.msra.mxu0 0.0
    %134 = vmatprep.subr.mxu0 0.0
    %135 = vmatpush1.msra.mxu0 0.0
    %136 = vmatprep.subr.mxu0 0.0
    %137 = vmatpush1.msra.mxu0 0.0
    %138 = vmatprep.subr.mxu0 0.0
    %139 = vmatpush1.msra.mxu0 0.0
    %140 = vmatprep.subr.mxu0 0.0
    %141 = vmatpush1.msra.mxu0 0.0
    %142 = vmatprep.subr.mxu0 0.0
    %143 = vmatpush1.msra.mxu0 0.0
    %144 = vmatprep.subr.mxu0 0.0
    %145 = vmatpush1.msra.mxu0 0.0
    %146 = vmatprep.subr.mxu0 0.0
    %147 = vmatpush1.msra.mxu0 0.0
    %148 = vmatprep.subr.mxu0 0.0
    %149 = vmatpush1.msra.mxu0 0.0
    %150 = vmatprep.subr.mxu0 0.0
    %151 = vmatpush1.msra.mxu0 0.0
    %152 = vmatprep.subr.mxu0 0.0
    %153 = vmatpush1.msra.mxu0 0.0
    %154 = vmatprep.subr.mxu0 0.0
    %155 = vmatpush1.msra.mxu0 0.0
    %156 = vmatprep.subr.mxu0 0.0
    %157 = vmatpush1.msra.mxu0 0.0
    %158 = vmatprep.subr.mxu0 0.0
    %159 = vmatpush1.msra.mxu0 0.0
    %160 = vmatprep.subr.mxu0 0.0
    %161 = vmatpush1.msra.mxu0 0.0
    %162 = vmatprep.subr.mxu0 0.0
    %163 = vmatpush1.msra.mxu0 0.0
    %164 = vmatprep.subr.mxu0 0.0
    %165 = vmatpush1.msra.mxu0 0.0
    %166 = vmatprep.subr.mxu0 0.0
    %167 = vmatpush1.msra.mxu0 0.0
    %168 = vmatprep.subr.mxu0 0.0
    %169 = vmatpush1.msra.mxu0 0.0
    %170 = vmatprep.subr.mxu0 0.0
    %171 = vmatpush1.msra.mxu0 0.0
    %172 = vmatprep.subr.mxu0 0.0
    %173 = vmatpush1.msra.mxu0 0.0
    %174 = vmatprep.subr.mxu0 0.0
    %175 = vmatpush1.msra.mxu0 0.0
    %176 = vmatprep.subr.mxu0 0.0
    %177 = vmatpush1.msra.mxu0 0.0
    %178 = vmatprep.mubr.f32.mxu0 0.0
    %179 = vmatmul.mubr.f32.gmra.mrb[0].mxu0 %v103
    %v180 = vpop.f32.mrb[0].mxu0
    %v181 = vadd.f32 0.0, %v180
    %v182 = vpop.f32.mrb[0].mxu0
    %v183 = vadd.f32 0.0, %v182
    %184 = vmatprep.mubr.f32.mxu0 0.0
    %185 = vmatmul.mubr.f32.gmra.mrb[0].mxu0 %v106
    %v186 = vpop.f32.mrb[0].mxu0
    %v187 = vadd.f32 0.0, %v186
    %v188 = vpop.f32.mrb[0].mxu0
    %v189 = vadd.f32 0.0, %v188
    %190 = vmatprep.mubr.f32.mxu0 0.0
    %191 = vmatmul.mubr.f32.gmra.mrb[0].mxu0 %v109
    %v192 = vpop.f32.mrb[0].mxu0
    %v193 = vadd.f32 0.0, %v192
    %v194 = vpop.f32.mrb[0].mxu0
    %v195 = vadd.f32 0.0, %v194
    %196 = vmatprep.mubr.f32.mxu0 0.0
    %197 = vmatmul.mubr.f32.gmra.mrb[0].mxu0 %v112
    %v198 = vpop.f32.mrb[0].mxu0
    %v199 = vadd.f32 0.0, %v198
    %v200 = vpop.f32.mrb[0].mxu0
    %v201 = vadd.f32 0.0, %v200
    %202 = vdwg.mxu0
    %v204 = vlaneseq
    %v205 = vshrl.u32 %v204, 7
    %v206 = vsub.s32 0, %v205
    %v207 = vrot.slane %v72, %v206
    %v208 = vlaneseq
    %v209 = vshrl.u32 %v208, 7
    %v210 = vsub.s32 1, %v209
    %v211 = vrot.slane %v72, %v210
    %v214 = vadd.f32 %v207, %v181
    %v215 = vadd.f32 %v211, %v183
    %v216 = vadd.f32 %v207, %v187
    %v217 = vadd.f32 %v211, %v189
    %v218 = vadd.f32 %v207, %v193
    %v219 = vadd.f32 %v211, %v195
    %v220 = vadd.f32 %v207, %v199
    %v221 = vadd.f32 %v211, %v201
    %vm222 = vcmp.eq.s32.totalorder %v68, 2
    %vm223 = vcmp.eq.s32.totalorder %v69, 2
    %vm224 = vcmp.eq.s32.totalorder %v70, 2
    %vm225 = vcmp.eq.s32.totalorder %v71, 2
    %v226 = vsel %vm222, 1, 0
    %v227 = vsel %vm223, 1, 0
    %v228 = vsel %vm224, 1, 0
    %v229 = vsel %vm225, 1, 0
    %v230 = vcvt.s32.f32 %v226
    %v231 = vcvt.s32.f32 %v227
    %v232 = vcvt.s32.f32 %v228
    %v233 = vcvt.s32.f32 %v229
    %v234 = vld [vmem:[#allocation2 + $0x80] sm:$0xff]
    %v235 = vld [vmem:[#allocation2 + $0x88] sm:$0xff]
    %v236 = vld [vmem:[#allocation2 + $0x90] sm:$0xff]
    %v237 = vld [vmem:[#allocation2 + $0x98] sm:$0xff]
    %v238 = vld [vmem:[#allocation2 + $0xa0] sm:$0xff]
    %v239 = vld [vmem:[#allocation2 + $0xa8] sm:$0xff]
    %v240 = vld [vmem:[#allocation2 + $0xb0] sm:$0xff]
    %v241 = vld [vmem:[#allocation2 + $0xb8] sm:$0xff]
    %v242 = vld [vmem:[#allocation2 + $0xc0] sm:$0xff]
    %v243 = vld [vmem:[#allocation2 + $0xc8] sm:$0xff]
    %v244 = vld [vmem:[#allocation2 + $0xd0] sm:$0xff]
    %v245 = vld [vmem:[#allocation2 + $0xd8] sm:$0xff]
    %v246 = vld [vmem:[#allocation2 + $0xe0] sm:$0xff]
    %v247 = vld [vmem:[#allocation2 + $0xe8] sm:$0xff]
    %v248 = vld [vmem:[#allocation2 + $0xf0] sm:$0xff]
    %v249 = vld [vmem:[#allocation2 + $0xf8] sm:$0xff]
    %v251 = vsel %vm101, %v230, 0
    %v254 = vsel %vm101, %v231, 0
    %v257 = vsel %vm101, %v232, 0
    %v260 = vsel %vm101, %v233, 0
    %262 = vmatprep.subr.mxu0 %v235
    %263 = vmatpush1.msra.mxu0 %v234
    %264 = vmatprep.subr.mxu0 %v237
    %265 = vmatpush1.msra.mxu0 %v236
    %266 = vmatprep.subr.mxu0 %v239
    %267 = vmatpush1.msra.mxu0 %v238
    %268 = vmatprep.subr.mxu0 %v241
    %269 = vmatpush1.msra.mxu0 %v240
    %270 = vmatprep.subr.mxu0 %v243
    %271 = vmatpush1.msra.mxu0 %v242
    %272 = vmatprep.subr.mxu0 %v245
    %273 = vmatpush1.msra.mxu0 %v244
    %274 = vmatprep.subr.mxu0 %v247
    %275 = vmatpush1.msra.mxu0 %v246
    %276 = vmatprep.subr.mxu0 %v249
    %277 = vmatpush1.msra.mxu0 %v248
    %278 = vmatprep.subr.mxu0 0.0
    %279 = vmatpush1.msra.mxu0 0.0
    %280 = vmatprep.subr.mxu0 0.0
    %281 = vmatpush1.msra.mxu0 0.0
    %282 = vmatprep.subr.mxu0 0.0
    %283 = vmatpush1.msra.mxu0 0.0
    %284 = vmatprep.subr.mxu0 0.0
    %285 = vmatpush1.msra.mxu0 0.0
    %286 = vmatprep.subr.mxu0 0.0
    %287 = vmatpush1.msra.mxu0 0.0
    %288 = vmatprep.subr.mxu0 0.0
    %289 = vmatpush1.msra.mxu0 0.0
    %290 = vmatprep.subr.mxu0 0.0
    %291 = vmatpush1.msra.mxu0 0.0
    %292 = vmatprep.subr.mxu0 0.0
    %293 = vmatpush1.msra.mxu0 0.0
    %294 = vmatprep.subr.mxu0 0.0
    %295 = vmatpush1.msra.mxu0 0.0
    %296 = vmatprep.subr.mxu0 0.0
    %297 = vmatpush1.msra.mxu0 0.0
    %298 = vmatprep.subr.mxu0 0.0
    %299 = vmatpush1.msra.mxu0 0.0
    %300 = vmatprep.subr.mxu0 0.0
    %301 = vmatpush1.msra.mxu0 0.0
    %302 = vmatprep.subr.mxu0 0.0
    %303 = vmatpush1.msra.mxu0 0.0
    %304 = vmatprep.subr.mxu0 0.0
    %305 = vmatpush1.msra.mxu0 0.0
    %306 = vmatprep.subr.mxu0 0.0
    %307 = vmatpush1.msra.mxu0 0.0
    %308 = vmatprep.subr.mxu0 0.0
    %309 = vmatpush1.msra.mxu0 0.0
    %310 = vmatprep.subr.mxu0 0.0
    %311 = vmatpush1.msra.mxu0 0.0
    %312 = vmatprep.subr.mxu0 0.0
    %313 = vmatpush1.msra.mxu0 0.0
    %314 = vmatprep.subr.mxu0 0.0
    %315 = vmatpush1.msra.mxu0 0.0
    %316 = vmatprep.subr.mxu0 0.0
    %317 = vmatpush1.msra.mxu0 0.0
    %318 = vmatprep.subr.mxu0 0.0
    %319 = vmatpush1.msra.mxu0 0.0
    %320 = vmatprep.subr.mxu0 0.0
    %321 = vmatpush1.msra.mxu0 0.0
    %322 = vmatprep.subr.mxu0 0.0
    %323 = vmatpush1.msra.mxu0 0.0
    %324 = vmatprep.subr.mxu0 0.0
    %325 = vmatpush1.msra.mxu0 0.0
    %326 = vmatprep.mubr.f32.mxu0 0.0
    %327 = vmatmul.mubr.f32.gmra.mrb[0].mxu0 %v251
    %v328 = vpop.f32.mrb[0].mxu0
    %v329 = vadd.f32 0.0, %v328
    %v330 = vpop.f32.mrb[0].mxu0
    %v331 = vadd.f32 0.0, %v330
    %332 = vmatprep.mubr.f32.mxu0 0.0
    %333 = vmatmul.mubr.f32.gmra.mrb[0].mxu0 %v254
    %v334 = vpop.f32.mrb[0].mxu0
    %v335 = vadd.f32 0.0, %v334
    %v336 = vpop.f32.mrb[0].mxu0
    %v337 = vadd.f32 0.0, %v336
    %338 = vmatprep.mubr.f32.mxu0 0.0
    %339 = vmatmul.mubr.f32.gmra.mrb[0].mxu0 %v257
    %v340 = vpop.f32.mrb[0].mxu0
    %v341 = vadd.f32 0.0, %v340
    %v342 = vpop.f32.mrb[0].mxu0
    %v343 = vadd.f32 0.0, %v342
    %344 = vmatprep.mubr.f32.mxu0 0.0
    %345 = vmatmul.mubr.f32.gmra.mrb[0].mxu0 %v260
    %v346 = vpop.f32.mrb[0].mxu0
    %v347 = vadd.f32 0.0, %v346
    %v348 = vpop.f32.mrb[0].mxu0
    %v349 = vadd.f32 0.0, %v348
    %350 = vdwg.mxu0
    %v351 = vadd.f32 %v214, %v329
    %v352 = vadd.f32 %v215, %v331
    %v353 = vadd.f32 %v216, %v335
    %v354 = vadd.f32 %v217, %v337
    %v355 = vadd.f32 %v218, %v341
    %v356 = vadd.f32 %v219, %v343
    %v357 = vadd.f32 %v220, %v347
    %v358 = vadd.f32 %v221, %v349
    %vm359 = vcmp.eq.s32.totalorder %v68, 3
    %vm360 = vcmp.eq.s32.totalorder %v69, 3
    %vm361 = vcmp.eq.s32.totalorder %v70, 3
    %vm362 = vcmp.eq.s32.totalorder %v71, 3
    %v363 = vsel %vm359, 1, 0
    %v364 = vsel %vm360, 1, 0
    %v365 = vsel %vm361, 1, 0
    %v366 = vsel %vm362, 1, 0
    %v367 = vcvt.s32.f32 %v363
    %v368 = vcvt.s32.f32 %v364
    %v369 = vcvt.s32.f32 %v365
    %v370 = vcvt.s32.f32 %v366
    %v371 = vld [vmem:[#allocation2 + $0x100] sm:$0xff]
    %v372 = vld [vmem:[#allocation2 + $0x108] sm:$0xff]
    %v373 = vld [vmem:[#allocation2 + $0x110] sm:$0xff]
    %v374 = vld [vmem:[#allocation2 + $0x118] sm:$0xff]
    %v375 = vld [vmem:[#allocation2 + $0x120] sm:$0xff]
    %v376 = vld [vmem:[#allocation2 + $0x128] sm:$0xff]
    %v377 = vld [vmem:[#allocation2 + $0x130] sm:$0xff]
    %v378 = vld [vmem:[#allocation2 + $0x138] sm:$0xff]
    %v379 = vld [vmem:[#allocation2 + $0x140] sm:$0xff]
    %v380 = vld [vmem:[#allocation2 + $0x148] sm:$0xff]
    %v381 = vld [vmem:[#allocation2 + $0x150] sm:$0xff]
    %v382 = vld [vmem:[#allocation2 + $0x158] sm:$0xff]
    %v383 = vld [vmem:[#allocation2 + $0x160] sm:$0xff]
    %v384 = vld [vmem:[#allocation2 + $0x168] sm:$0xff]
    %v385 = vld [vmem:[#allocation2 + $0x170] sm:$0xff]
    %v386 = vld [vmem:[#allocation2 + $0x178] sm:$0xff]
    %v388 = vsel %vm101, %v367, 0
    %v391 = vsel %vm101, %v368, 0
    %v394 = vsel %vm101, %v369, 0
    %v397 = vsel %vm101, %v370, 0
    %399 = vmatprep.subr.mxu0 %v372
    %400 = vmatpush1.msra.mxu0 %v371
    %401 = vmatprep.subr.mxu0 %v374
    %402 = vmatpush1.msra.mxu0 %v373
    %403 = vmatprep.subr.mxu0 %v376
    %404 = vmatpush1.msra.mxu0 %v375
    %405 = vmatprep.subr.mxu0 %v378
    %406 = vmatpush1.msra.mxu0 %v377
    %407 = vmatprep.subr.mxu0 %v380
    %408 = vmatpush1.msra.mxu0 %v379
    %409 = vmatprep.subr.mxu0 %v382
    %410 = vmatpush1.msra.mxu0 %v381
    %411 = vmatprep.subr.mxu0 %v384
    %412 = vmatpush1.msra.mxu0 %v383
    %413 = vmatprep.subr.mxu0 %v386
    %414 = vmatpush1.msra.mxu0 %v385
    %415 = vmatprep.subr.mxu0 0.0
    %416 = vmatpush1.msra.mxu0 0.0
    %417 = vmatprep.subr.mxu0 0.0
    %418 = vmatpush1.msra.mxu0 0.0
    %419 = vmatprep.subr.mxu0 0.0
    %420 = vmatpush1.msra.mxu0 0.0
    %421 = vmatprep.subr.mxu0 0.0
    %422 = vmatpush1.msra.mxu0 0.0
    %423 = vmatprep.subr.mxu0 0.0
    %424 = vmatpush1.msra.mxu0 0.0
    %425 = vmatprep.subr.mxu0 0.0
    %426 = vmatpush1.msra.mxu0 0.0
    %427 = vmatprep.subr.mxu0 0.0
    %428 = vmatpush1.msra.mxu0 0.0
    %429 = vmatprep.subr.mxu0 0.0
    %430 = vmatpush1.msra.mxu0 0.0
    %431 = vmatprep.subr.mxu0 0.0
    %432 = vmatpush1.msra.mxu0 0.0
    %433 = vmatprep.subr.mxu0 0.0
    %434 = vmatpush1.msra.mxu0 0.0
    %435 = vmatprep.subr.mxu0 0.0
    %436 = vmatpush1.msra.mxu0 0.0
    %437 = vmatprep.subr.mxu0 0.0
    %438 = vmatpush1.msra.mxu0 0.0
    %439 = vmatprep.subr.mxu0 0.0
    %440 = vmatpush1.msra.mxu0 0.0
    %441 = vmatprep.subr.mxu0 0.0
    %442 = vmatpush1.msra.mxu0 0.0
    %443 = vmatprep.subr.mxu0 0.0
    %444 = vmatpush1.msra.mxu0 0.0
    %445 = vmatprep.subr.mxu0 0.0
    %446 = vmatpush1.msra.mxu0 0.0
    %447 = vmatprep.subr.mxu0 0.0
    %448 = vmatpush1.msra.mxu0 0.0
    %449 = vmatprep.subr.mxu0 0.0
    %450 = vmatpush1.msra.mxu0 0.0
    %451 = vmatprep.subr.mxu0 0.0
    %452 = vmatpush1.msra.mxu0 0.0
    %453 = vmatprep.subr.mxu0 0.0
    %454 = vmatpush1.msra.mxu0 0.0
    %455 = vmatprep.subr.mxu0 0.0
    %456 = vmatpush1.msra.mxu0 0.0
    %457 = vmatprep.subr.mxu0 0.0
    %458 = vmatpush1.msra.mxu0 0.0
    %459 = vmatprep.subr.mxu0 0.0
    %460 = vmatpush1.msra.mxu0 0.0
    %461 = vmatprep.subr.mxu0 0.0
    %462 = vmatpush1.msra.mxu0 0.0
    %463 = vmatprep.mubr.f32.mxu0 0.0
    %464 = vmatmul.mubr.f32.gmra.mrb[0].mxu0 %v388
    %v465 = vpop.f32.mrb[0].mxu0
    %v466 = vadd.f32 0.0, %v465
    %v467 = vpop.f32.mrb[0].mxu0
    %v468 = vadd.f32 0.0, %v467
    %469 = vmatprep.mubr.f32.mxu0 0.0
    %470 = vmatmul.mubr.f32.gmra.mrb[0].mxu0 %v391
    %v471 = vpop.f32.mrb[0].mxu0
    %v472 = vadd.f32 0.0, %v471
    %v473 = vpop.f32.mrb[0].mxu0
    %v474 = vadd.f32 0.0, %v473
    %475 = vmatprep.mubr.f32.mxu0 0.0
    %476 = vmatmul.mubr.f32.gmra.mrb[0].mxu0 %v394
    %v477 = vpop.f32.mrb[0].mxu0
    %v478 = vadd.f32 0.0, %v477
    %v479 = vpop.f32.mrb[0].mxu0
    %v480 = vadd.f32 0.0, %v479
    %481 = vmatprep.mubr.f32.mxu0 0.0
    %482 = vmatmul.mubr.f32.gmra.mrb[0].mxu0 %v397
    %v483 = vpop.f32.mrb[0].mxu0
    %v484 = vadd.f32 0.0, %v483
    %v485 = vpop.f32.mrb[0].mxu0
    %v486 = vadd.f32 0.0, %v485
    %487 = vdwg.mxu0
    %v488 = vadd.f32 %v351, %v466
    %v489 = vadd.f32 %v352, %v468
    %v490 = vadd.f32 %v353, %v472
    %v491 = vadd.f32 %v354, %v474
    %v492 = vadd.f32 %v355, %v478
    %v493 = vadd.f32 %v356, %v480
    %v494 = vadd.f32 %v357, %v484
    %v495 = vadd.f32 %v358, %v486
    %vm496 = vcmp.eq.s32.totalorder %v68, 4
    %vm497 = vcmp.eq.s32.totalorder %v69, 4
    %vm498 = vcmp.eq.s32.totalorder %v70, 4
    %vm499 = vcmp.eq.s32.totalorder %v71, 4
    %v500 = vsel %vm496, 1, 0
    %v501 = vsel %vm497, 1, 0
    %v502 = vsel %vm498, 1, 0
    %v503 = vsel %vm499, 1, 0
    %v504 = vcvt.s32.f32 %v500
    %v505 = vcvt.s32.f32 %v501
    %v506 = vcvt.s32.f32 %v502
    %v507 = vcvt.s32.f32 %v503
    %v508 = vld [vmem:[#allocation2 + $0x180] sm:$0xff]
    %v509 = vld [vmem:[#allocation2 + $0x188] sm:$0xff]
    %v510 = vld [vmem:[#allocation2 + $0x190] sm:$0xff]
    %v511 = vld [vmem:[#allocation2 + $0x198] sm:$0xff]
    %v512 = vld [vmem:[#allocation2 + $0x1a0] sm:$0xff]
    %v513 = vld [vmem:[#allocation2 + $0x1a8] sm:$0xff]
    %v514 = vld [vmem:[#allocation2 + $0x1b0] sm:$0xff]
    %v515 = vld [vmem:[#allocation2 + $0x1b8] sm:$0xff]
    %v516 = vld [vmem:[#allocation2 + $0x1c0] sm:$0xff]
    %v517 = vld [vmem:[#allocation2 + $0x1c8] sm:$0xff]
    %v518 = vld [vmem:[#allocation2 + $0x1d0] sm:$0xff]
    %v519 = vld [vmem:[#allocation2 + $0x1d8] sm:$0xff]
    %v520 = vld [vmem:[#allocation2 + $0x1e0] sm:$0xff]
    %v521 = vld [vmem:[#allocation2 + $0x1e8] sm:$0xff]
    %v522 = vld [vmem:[#allocation2 + $0x1f0] sm:$0xff]
    %v523 = vld [vmem:[#allocation2 + $0x1f8] sm:$0xff]
    %v525 = vsel %vm101, %v504, 0
    %v528 = vsel %vm101, %v505, 0
    %v531 = vsel %vm101, %v506, 0
    %v534 = vsel %vm101, %v507, 0
    %536 = vmatprep.subr.mxu0 %v509
    %537 = vmatpush1.msra.mxu0 %v508
    %538 = vmatprep.subr.mxu0 %v511
    %539 = vmatpush1.msra.mxu0 %v510
    %540 = vmatprep.subr.mxu0 %v513
    %541 = vmatpush1.msra.mxu0 %v512
    %542 = vmatprep.subr.mxu0 %v515
    %543 = vmatpush1.msra.mxu0 %v514
    %544 = vmatprep.subr.mxu0 %v517
    %545 = vmatpush1.msra.mxu0 %v516
    %546 = vmatprep.subr.mxu0 %v519
    %547 = vmatpush1.msra.mxu0 %v518
    %548 = vmatprep.subr.mxu0 %v521
    %549 = vmatpush1.msra.mxu0 %v520
    %550 = vmatprep.subr.mxu0 %v523
    %551 = vmatpush1.msra.mxu0 %v522
    %552 = vmatprep.subr.mxu0 0.0
    %553 = vmatpush1.msra.mxu0 0.0
    %554 = vmatprep.subr.mxu0 0.0
    %555 = vmatpush1.msra.mxu0 0.0
    %556 = vmatprep.subr.mxu0 0.0
    %557 = vmatpush1.msra.mxu0 0.0
    %558 = vmatprep.subr.mxu0 0.0
    %559 = vmatpush1.msra.mxu0 0.0
    %560 = vmatprep.subr.mxu0 0.0
    %561 = vmatpush1.msra.mxu0 0.0
    %562 = vmatprep.subr.mxu0 0.0
    %563 = vmatpush1.msra.mxu0 0.0
    %564 = vmatprep.subr.mxu0 0.0
    %565 = vmatpush1.msra.mxu0 0.0
    %566 = vmatprep.subr.mxu0 0.0
    %567 = vmatpush1.msra.mxu0 0.0
    %568 = vmatprep.subr.mxu0 0.0
    %569 = vmatpush1.msra.mxu0 0.0
    %570 = vmatprep.subr.mxu0 0.0
    %571 = vmatpush1.msra.mxu0 0.0
    %572 = vmatprep.subr.mxu0 0.0
    %573 = vmatpush1.msra.mxu0 0.0
    %574 = vmatprep.subr.mxu0 0.0
    %575 = vmatpush1.msra.mxu0 0.0
    %576 = vmatprep.subr.mxu0 0.0
    %577 = vmatpush1.msra.mxu0 0.0
    %578 = vmatprep.subr.mxu0 0.0
    %579 = vmatpush1.msra.mxu0 0.0
    %580 = vmatprep.subr.mxu0 0.0
    %581 = vmatpush1.msra.mxu0 0.0
    %582 = vmatprep.subr.mxu0 0.0
    %583 = vmatpush1.msra.mxu0 0.0
    %584 = vmatprep.subr.mxu0 0.0
    %585 = vmatpush1.msra.mxu0 0.0
    %586 = vmatprep.subr.mxu0 0.0
    %587 = vmatpush1.msra.mxu0 0.0
    %588 = vmatprep.subr.mxu0 0.0
    %589 = vmatpush1.msra.mxu0 0.0
    %590 = vmatprep.subr.mxu0 0.0
    %591 = vmatpush1.msra.mxu0 0.0
    %592 = vmatprep.subr.mxu0 0.0
    %593 = vmatpush1.msra.mxu0 0.0
    %594 = vmatprep.subr.mxu0 0.0
    %595 = vmatpush1.msra.mxu0 0.0
    %596 = vmatprep.subr.mxu0 0.0
    %597 = vmatpush1.msra.mxu0 0.0
    %598 = vmatprep.subr.mxu0 0.0
    %599 = vmatpush1.msra.mxu0 0.0
    %600 = vmatprep.mubr.f32.mxu0 0.0
    %601 = vmatmul.mubr.f32.gmra.mrb[0].mxu0 %v525
    %v602 = vpop.f32.mrb[0].mxu0
    %v603 = vadd.f32 0.0, %v602
    %v604 = vpop.f32.mrb[0].mxu0
    %v605 = vadd.f32 0.0, %v604
    %606 = vmatprep.mubr.f32.mxu0 0.0
    %607 = vmatmul.mubr.f32.gmra.mrb[0].mxu0 %v528
    %v608 = vpop.f32.mrb[0].mxu0
    %v609 = vadd.f32 0.0, %v608
    %v610 = vpop.f32.mrb[0].mxu0
    %v611 = vadd.f32 0.0, %v610
    %612 = vmatprep.mubr.f32.mxu0 0.0
    %613 = vmatmul.mubr.f32.gmra.mrb[0].mxu0 %v531
    %v614 = vpop.f32.mrb[0].mxu0
    %v615 = vadd.f32 0.0, %v614
    %v616 = vpop.f32.mrb[0].mxu0
    %v617 = vadd.f32 0.0, %v616
    %618 = vmatprep.mubr.f32.mxu0 0.0
    %619 = vmatmul.mubr.f32.gmra.mrb[0].mxu0 %v534
    %v620 = vpop.f32.mrb[0].mxu0
    %v621 = vadd.f32 0.0, %v620
    %v622 = vpop.f32.mrb[0].mxu0
    %v623 = vadd.f32 0.0, %v622
    %624 = vdwg.mxu0
    %v625 = vadd.f32 %v488, %v603
    %v626 = vadd.f32 %v489, %v605
    %v627 = vadd.f32 %v490, %v609
    %v628 = vadd.f32 %v491, %v611
    %v629 = vadd.f32 %v492, %v615
    %v630 = vadd.f32 %v493, %v617
    %v631 = vadd.f32 %v494, %v621
    %v632 = vadd.f32 %v495, %v623
    %vm633 = vcmp.eq.s32.totalorder %v68, 0
    %vm634 = vcmp.eq.s32.totalorder %v69, 0
    %vm635 = vcmp.eq.s32.totalorder %v70, 0
    %vm636 = vcmp.eq.s32.totalorder %v71, 0
    %v637 = vsel %vm633, 1, 0
    %v638 = vsel %vm634, 1, 0
    %v639 = vsel %vm635, 1, 0
    %v640 = vsel %vm636, 1, 0
    %v641 = vcvt.s32.f32 %v637
    %v642 = vcvt.s32.f32 %v638
    %v643 = vcvt.s32.f32 %v639
    %v644 = vcvt.s32.f32 %v640
    %v645 = vld [vmem:[#allocation2 + $0x200] sm:$0xff]
    %v646 = vld [vmem:[#allocation2 + $0x208] sm:$0xff]
    %v647 = vld [vmem:[#allocation2 + $0x210] sm:$0xff]
    %v648 = vld [vmem:[#allocation2 + $0x218] sm:$0xff]
    %v649 = vld [vmem:[#allocation2 + $0x220] sm:$0xff]
    %v650 = vld [vmem:[#allocation2 + $0x228] sm:$0xff]
    %v651 = vld [vmem:[#allocation2 + $0x230] sm:$0xff]
    %v652 = vld [vmem:[#allocation2 + $0x238] sm:$0xff]
    %v653 = vld [vmem:[#allocation2 + $0x240] sm:$0xff]
    %v654 = vld [vmem:[#allocation2 + $0x248] sm:$0xff]
    %v655 = vld [vmem:[#allocation2 + $0x250] sm:$0xff]
    %v656 = vld [vmem:[#allocation2 + $0x258] sm:$0xff]
    %v657 = vld [vmem:[#allocation2 + $0x260] sm:$0xff]
    %v658 = vld [vmem:[#allocation2 + $0x268] sm:$0xff]
    %v659 = vld [vmem:[#allocation2 + $0x270] sm:$0xff]
    %v660 = vld [vmem:[#allocation2 + $0x278] sm:$0xff]
    %v662 = vsel %vm101, %v641, 0
    %v665 = vsel %vm101, %v642, 0
    %v668 = vsel %vm101, %v643, 0
    %v671 = vsel %vm101, %v644, 0
    %673 = vmatprep.subr.mxu0 %v646
    %674 = vmatpush1.msra.mxu0 %v645
    %675 = vmatprep.subr.mxu0 %v648
    %676 = vmatpush1.msra.mxu0 %v647
    %677 = vmatprep.subr.mxu0 %v650
    %678 = vmatpush1.msra.mxu0 %v649
    %679 = vmatprep.subr.mxu0 %v652
    %680 = vmatpush1.msra.mxu0 %v651
    %681 = vmatprep.subr.mxu0 %v654
    %682 = vmatpush1.msra.mxu0 %v653
    %683 = vmatprep.subr.mxu0 %v656
    %684 = vmatpush1.msra.mxu0 %v655
    %685 = vmatprep.subr.mxu0 %v658
    %686 = vmatpush1.msra.mxu0 %v657
    %687 = vmatprep.subr.mxu0 %v660
    %688 = vmatpush1.msra.mxu0 %v659
    %689 = vmatprep.subr.mxu0 0.0
    %690 = vmatpush1.msra.mxu0 0.0
    %691 = vmatprep.subr.mxu0 0.0
    %692 = vmatpush1.msra.mxu0 0.0
    %693 = vmatprep.subr.mxu0 0.0
    %694 = vmatpush1.msra.mxu0 0.0
    %695 = vmatprep.subr.mxu0 0.0
    %696 = vmatpush1.msra.mxu0 0.0
    %697 = vmatprep.subr.mxu0 0.0
    %698 = vmatpush1.msra.mxu0 0.0
    %699 = vmatprep.subr.mxu0 0.0
    %700 = vmatpush1.msra.mxu0 0.0
    %701 = vmatprep.subr.mxu0 0.0
    %702 = vmatpush1.msra.mxu0 0.0
    %703 = vmatprep.subr.mxu0 0.0
    %704 = vmatpush1.msra.mxu0 0.0
    %705 = vmatprep.subr.mxu0 0.0
    %706 = vmatpush1.msra.mxu0 0.0
    %707 = vmatprep.subr.mxu0 0.0
    %708 = vmatpush1.msra.mxu0 0.0
    %709 = vmatprep.subr.mxu0 0.0
    %710 = vmatpush1.msra.mxu0 0.0
    %711 = vmatprep.subr.mxu0 0.0
    %712 = vmatpush1.msra.mxu0 0.0
    %713 = vmatprep.subr.mxu0 0.0
    %714 = vmatpush1.msra.mxu0 0.0
    %715 = vmatprep.subr.mxu0 0.0
    %716 = vmatpush1.msra.mxu0 0.0
    %717 = vmatprep.subr.mxu0 0.0
    %718 = vmatpush1.msra.mxu0 0.0
    %719 = vmatprep.subr.mxu0 0.0
    %720 = vmatpush1.msra.mxu0 0.0
    %721 = vmatprep.subr.mxu0 0.0
    %722 = vmatpush1.msra.mxu0 0.0
    %723 = vmatprep.subr.mxu0 0.0
    %724 = vmatpush1.msra.mxu0 0.0
    %725 = vmatprep.subr.mxu0 0.0
    %726 = vmatpush1.msra.mxu0 0.0
    %727 = vmatprep.subr.mxu0 0.0
    %728 = vmatpush1.msra.mxu0 0.0
    %729 = vmatprep.subr.mxu0 0.0
    %730 = vmatpush1.msra.mxu0 0.0
    %731 = vmatprep.subr.mxu0 0.0
    %732 = vmatpush1.msra.mxu0 0.0
    %733 = vmatprep.subr.mxu0 0.0
    %734 = vmatpush1.msra.mxu0 0.0
    %735 = vmatprep.subr.mxu0 0.0
    %736 = vmatpush1.msra.mxu0 0.0
    %737 = vmatprep.mubr.f32.mxu0 0.0
    %738 = vmatmul.mubr.f32.gmra.mrb[0].mxu0 %v662
    %v739 = vpop.f32.mrb[0].mxu0
    %v740 = vadd.f32 0.0, %v739
    %v741 = vpop.f32.mrb[0].mxu0
    %v742 = vadd.f32 0.0, %v741
    %743 = vmatprep.mubr.f32.mxu0 0.0
    %744 = vmatmul.mubr.f32.gmra.mrb[0].mxu0 %v665
    %v745 = vpop.f32.mrb[0].mxu0
    %v746 = vadd.f32 0.0, %v745
    %v747 = vpop.f32.mrb[0].mxu0
    %v748 = vadd.f32 0.0, %v747
    %749 = vmatprep.mubr.f32.mxu0 0.0
    %750 = vmatmul.mubr.f32.gmra.mrb[0].mxu0 %v668
    %v751 = vpop.f32.mrb[0].mxu0
    %v752 = vadd.f32 0.0, %v751
    %v753 = vpop.f32.mrb[0].mxu0
    %v754 = vadd.f32 0.0, %v753
    %755 = vmatprep.mubr.f32.mxu0 0.0
    %756 = vmatmul.mubr.f32.gmra.mrb[0].mxu0 %v671
    %v757 = vpop.f32.mrb[0].mxu0
    %v758 = vadd.f32 0.0, %v757
    %v759 = vpop.f32.mrb[0].mxu0
    %v760 = vadd.f32 0.0, %v759
    %761 = vdwg.mxu0
    %v762 = vadd.f32 %v625, %v740
    %v763 = vadd.f32 %v626, %v742
    %v764 = vadd.f32 %v627, %v746
    %v765 = vadd.f32 %v628, %v748
    %v766 = vadd.f32 %v629, %v752
    %v767 = vadd.f32 %v630, %v754
    %v768 = vadd.f32 %v631, %v758
    %v769 = vadd.f32 %v632, %v760
    %v770 = vmul.f32 %v762, 0.2
    %v771 = vmul.f32 %v763, 0.2
    %v772 = vmul.f32 %v764, 0.2
    %v773 = vmul.f32 %v765, 0.2
    %v774 = vmul.f32 %v766, 0.2
    %v775 = vmul.f32 %v767, 0.2
    %v776 = vmul.f32 %v768, 0.2
    %v777 = vmul.f32 %v769, 0.2
    %v778 = vmax.f32 %v762, %v770
    %v779 = vmax.f32 %v763, %v771
    %v780 = vmax.f32 %v764, %v772
    %v781 = vmax.f32 %v765, %v773
    %v782 = vmax.f32 %v766, %v774
    %v783 = vmax.f32 %v767, %v775
    %v784 = vmax.f32 %v768, %v776
    %v785 = vmax.f32 %v769, %v777
    %v786 = vld [vmem:[#allocation4] sm:$0xff]
    %v787 = vld [vmem:[#allocation4 + $0x8] sm:$0xff]
    %v788 = vld [vmem:[#allocation4 + $0x10] sm:$0xff]
    %v789 = vld [vmem:[#allocation4 + $0x18] sm:$0xff]
    %v790 = vld [vmem:[#allocation4 + $0x20] sm:$0xff]
    %v791 = vld [vmem:[#allocation4 + $0x28] sm:$0xff]
    %v792 = vld [vmem:[#allocation4 + $0x30] sm:$0xff]
    %v793 = vld [vmem:[#allocation4 + $0x38] sm:$0xff]
    %v794 = vld [vmem:[#allocation4 + $0x40] sm:$0xff]
    %v795 = vld [vmem:[#allocation4 + $0x48] sm:$0xff]
    %v796 = vld [vmem:[#allocation4 + $0x50] sm:$0xff]
    %v797 = vld [vmem:[#allocation4 + $0x58] sm:$0xff]
    %v798 = vld [vmem:[#allocation4 + $0x60] sm:$0xff]
    %v799 = vld [vmem:[#allocation4 + $0x68] sm:$0xff]
    %v800 = vld [vmem:[#allocation4 + $0x70] sm:$0xff]
    %v801 = vld [vmem:[#allocation4 + $0x78] sm:$0xff]
    %v802 = vld [vmem:[#allocation4 + $0x80] sm:$0xff]
    %v803 = vld [vmem:[#allocation4 + $0x88] sm:$0xff]
    %v804 = vld [vmem:[#allocation4 + $0x90] sm:$0xff]
    %v805 = vld [vmem:[#allocation4 + $0x98] sm:$0xff]
    %v806 = vld [vmem:[#allocation4 + $0xa0] sm:$0xff]
    %v807 = vld [vmem:[#allocation4 + $0xa8] sm:$0xff]
    %v808 = vld [vmem:[#allocation4 + $0xb0] sm:$0xff]
    %v809 = vld [vmem:[#allocation4 + $0xb8] sm:$0xff]
    %v810 = vld [vmem:[#allocation4 + $0xc0] sm:$0xff]
    %v811 = vld [vmem:[#allocation4 + $0xc8] sm:$0xff]
    %v812 = vld [vmem:[#allocation4 + $0xd0] sm:$0xff]
    %v813 = vld [vmem:[#allocation4 + $0xd8] sm:$0xff]
    %v814 = vld [vmem:[#allocation4 + $0xe0] sm:$0xff]
    %v815 = vld [vmem:[#allocation4 + $0xe8] sm:$0xff]
    %v816 = vld [vmem:[#allocation4 + $0xf0] sm:$0xff]
    %v817 = vld [vmem:[#allocation4 + $0xf8] sm:$0xff]
    %v818 = vld [vmem:[#allocation4 + $0x100] sm:$0xff]
    %v819 = vld [vmem:[#allocation4 + $0x108] sm:$0xff]
    %v820 = vld [vmem:[#allocation4 + $0x110] sm:$0xff]
    %v821 = vld [vmem:[#allocation4 + $0x118] sm:$0xff]
    %v822 = vld [vmem:[#allocation4 + $0x120] sm:$0xff]
    %v823 = vld [vmem:[#allocation4 + $0x128] sm:$0xff]
    %v824 = vld [vmem:[#allocation4 + $0x130] sm:$0xff]
    %v825 = vld [vmem:[#allocation4 + $0x138] sm:$0xff]
    %v826 = vld [vmem:[#allocation4 + $0x140] sm:$0xff]
    %v827 = vld [vmem:[#allocation4 + $0x148] sm:$0xff]
    %v828 = vld [vmem:[#allocation4 + $0x150] sm:$0xff]
    %v829 = vld [vmem:[#allocation4 + $0x158] sm:$0xff]
    %v830 = vld [vmem:[#allocation4 + $0x160] sm:$0xff]
    %v831 = vld [vmem:[#allocation4 + $0x168] sm:$0xff]
    %v832 = vld [vmem:[#allocation4 + $0x170] sm:$0xff]
    %v833 = vld [vmem:[#allocation4 + $0x178] sm:$0xff]
    %v834 = vld [vmem:[#allocation4 + $0x180] sm:$0xff]
    %v835 = vld [vmem:[#allocation4 + $0x188] sm:$0xff]
    %v836 = vld [vmem:[#allocation4 + $0x190] sm:$0xff]
    %v837 = vld [vmem:[#allocation4 + $0x198] sm:$0xff]
    %v838 = vld [vmem:[#allocation4 + $0x1a0] sm:$0xff]
    %v839 = vld [vmem:[#allocation4 + $0x1a8] sm:$0xff]
    %v840 = vld [vmem:[#allocation4 + $0x1b0] sm:$0xff]
    %v841 = vld [vmem:[#allocation4 + $0x1b8] sm:$0xff]
    %v842 = vld [vmem:[#allocation4 + $0x1c0] sm:$0xff]
    %v843 = vld [vmem:[#allocation4 + $0x1c8] sm:$0xff]
    %v844 = vld [vmem:[#allocation4 + $0x1d0] sm:$0xff]
    %v845 = vld [vmem:[#allocation4 + $0x1d8] sm:$0xff]
    %v846 = vld [vmem:[#allocation4 + $0x1e0] sm:$0xff]
    %v847 = vld [vmem:[#allocation4 + $0x1e8] sm:$0xff]
    %v848 = vld [vmem:[#allocation4 + $0x1f0] sm:$0xff]
    %v849 = vld [vmem:[#allocation4 + $0x1f8] sm:$0xff]
    %v850 = vld [vmem:[%s4] sm:$0x3]
    %v852 = vlaneseq
    %v853 = vshrl.u32 %v852, 7
    %v854 = vsub.s32 0, %v853
    %v855 = vrot.slane %v850, %v854
    %v856 = vlaneseq
    %v857 = vshrl.u32 %v856, 7
    %v858 = vsub.s32 1, %v857
    %v859 = vrot.slane %v850, %v858
    %862 = vmatprep.subr.mxu0 %v787
    %863 = vmatpush1.msra.mxu0 %v786
    %864 = vmatprep.subr.mxu0 %v789
    %865 = vmatpush1.msra.mxu0 %v788
    %866 = vmatprep.subr.mxu0 %v791
    %867 = vmatpush1.msra.mxu0 %v790
    %868 = vmatprep.subr.mxu0 %v793
    %869 = vmatpush1.msra.mxu0 %v792
    %870 = vmatprep.subr.mxu0 %v795
    %871 = vmatpush1.msra.mxu0 %v794
    %872 = vmatprep.subr.mxu0 %v797
    %873 = vmatpush1.msra.mxu0 %v796
    %874 = vmatprep.subr.mxu0 %v799
    %875 = vmatpush1.msra.mxu0 %v798
    %876 = vmatprep.subr.mxu0 %v801
    %877 = vmatpush1.msra.mxu0 %v800
    %878 = vmatprep.subr.mxu0 %v803
    %879 = vmatpush1.msra.mxu0 %v802
    %880 = vmatprep.subr.mxu0 %v805
    %881 = vmatpush1.msra.mxu0 %v804
    %882 = vmatprep.subr.mxu0 %v807
    %883 = vmatpush1.msra.mxu0 %v806
    %884 = vmatprep.subr.mxu0 %v809
    %885 = vmatpush1.msra.mxu0 %v808
    %886 = vmatprep.subr.mxu0 %v811
    %887 = vmatpush1.msra.mxu0 %v810
    %888 = vmatprep.subr.mxu0 %v813
    %889 = vmatpush1.msra.mxu0 %v812
    %890 = vmatprep.subr.mxu0 %v815
    %891 = vmatpush1.msra.mxu0 %v814
    %892 = vmatprep.subr.mxu0 %v817
    %893 = vmatpush1.msra.mxu0 %v816
    %894 = vmatprep.subr.mxu0 %v819
    %895 = vmatpush1.msra.mxu0 %v818
    %896 = vmatprep.subr.mxu0 %v821
    %897 = vmatpush1.msra.mxu0 %v820
    %898 = vmatprep.subr.mxu0 %v823
    %899 = vmatpush1.msra.mxu0 %v822
    %900 = vmatprep.subr.mxu0 %v825
    %901 = vmatpush1.msra.mxu0 %v824
    %902 = vmatprep.subr.mxu0 %v827
    %903 = vmatpush1.msra.mxu0 %v826
    %904 = vmatprep.subr.mxu0 %v829
    %905 = vmatpush1.msra.mxu0 %v828
    %906 = vmatprep.subr.mxu0 %v831
    %907 = vmatpush1.msra.mxu0 %v830
    %908 = vmatprep.subr.mxu0 %v833
    %909 = vmatpush1.msra.mxu0 %v832
    %910 = vmatprep.subr.mxu0 %v835
    %911 = vmatpush1.msra.mxu0 %v834
    %912 = vmatprep.subr.mxu0 %v837
    %913 = vmatpush1.msra.mxu0 %v836
    %914 = vmatprep.subr.mxu0 %v839
    %915 = vmatpush1.msra.mxu0 %v838
    %916 = vmatprep.subr.mxu0 %v841
    %917 = vmatpush1.msra.mxu0 %v840
    %918 = vmatprep.subr.mxu0 %v843
    %919 = vmatpush1.msra.mxu0 %v842
    %920 = vmatprep.subr.mxu0 %v845
    %921 = vmatpush1.msra.mxu0 %v844
    %922 = vmatprep.subr.mxu0 %v847
    %923 = vmatpush1.msra.mxu0 %v846
    %924 = vmatprep.subr.mxu0 %v849
    %925 = vmatpush1.msra.mxu0 %v848
    %926 = vmatprep.mubr.f32.mxu0 %v779
    %927 = vmatmul.mubr.f32.gmra.mrb[0].mxu0 %v778
    %v928 = vpop.f32.mrb[0].mxu0
    %v929 = vadd.f32 %v855, %v928
    %v930 = vpop.f32.mrb[0].mxu0
    %v931 = vadd.f32 %v859, %v930
    %932 = vmatprep.mubr.f32.mxu0 %v781
    %933 = vmatmul.mubr.f32.gmra.mrb[0].mxu0 %v780
    %v934 = vpop.f32.mrb[0].mxu0
    %v935 = vadd.f32 %v855, %v934
    %v936 = vpop.f32.mrb[0].mxu0
    %v937 = vadd.f32 %v859, %v936
    %938 = vmatprep.mubr.f32.mxu0 %v783
    %939 = vmatmul.mubr.f32.gmra.mrb[0].mxu0 %v782
    %v940 = vpop.f32.mrb[0].mxu0
    %v941 = vadd.f32 %v855, %v940
    %v942 = vpop.f32.mrb[0].mxu0
    %v943 = vadd.f32 %v859, %v942
    %944 = vmatprep.mubr.f32.mxu0 %v785
    %945 = vmatmul.mubr.f32.gmra.mrb[0].mxu0 %v784
    %v946 = vpop.f32.mrb[0].mxu0
    %v947 = vadd.f32 %v855, %v946
    %v948 = vpop.f32.mrb[0].mxu0
    %v949 = vadd.f32 %v859, %v948
    %950 = vdwg.mxu0
    %v951 = vmul.f32 %v929, 0.2
    %v952 = vmul.f32 %v931, 0.2
    %v953 = vmul.f32 %v935, 0.2
    %v954 = vmul.f32 %v937, 0.2
    %v955 = vmul.f32 %v941, 0.2
    %v956 = vmul.f32 %v943, 0.2
    %v957 = vmul.f32 %v947, 0.2
    %v958 = vmul.f32 %v949, 0.2
    %v959 = vmax.f32 %v929, %v951
    %v960 = vmax.f32 %v931, %v952
    %v961 = vmax.f32 %v935, %v953
    %v962 = vmax.f32 %v937, %v954
    %v963 = vmax.f32 %v941, %v955
    %v964 = vmax.f32 %v943, %v956
    %v965 = vmax.f32 %v947, %v957
    %v966 = vmax.f32 %v949, %v958
    %v967 = vld [vmem:[#allocation6] sm:$0xff]
    %v968 = vld [vmem:[#allocation6 + $0x8] sm:$0xff]
    %v969 = vld [vmem:[#allocation6 + $0x10] sm:$0xff]
    %v970 = vld [vmem:[#allocation6 + $0x18] sm:$0xff]
    %v971 = vld [vmem:[#allocation6 + $0x20] sm:$0xff]
    %v972 = vld [vmem:[#allocation6 + $0x28] sm:$0xff]
    %v973 = vld [vmem:[#allocation6 + $0x30] sm:$0xff]
    %v974 = vld [vmem:[#allocation6 + $0x38] sm:$0xff]
    %v975 = vld [vmem:[#allocation6 + $0x40] sm:$0xff]
    %v976 = vld [vmem:[#allocation6 + $0x48] sm:$0xff]
    %v977 = vld [vmem:[#allocation6 + $0x50] sm:$0xff]
    %v978 = vld [vmem:[#allocation6 + $0x58] sm:$0xff]
    %v979 = vld [vmem:[#allocation6 + $0x60] sm:$0xff]
    %v980 = vld [vmem:[#allocation6 + $0x68] sm:$0xff]
    %v981 = vld [vmem:[#allocation6 + $0x70] sm:$0xff]
    %v982 = vld [vmem:[#allocation6 + $0x78] sm:$0xff]
    %v983 = vld [vmem:[#allocation6 + $0x80] sm:$0xff]
    %v984 = vld [vmem:[#allocation6 + $0x88] sm:$0xff]
    %v985 = vld [vmem:[#allocation6 + $0x90] sm:$0xff]
    %v986 = vld [vmem:[#allocation6 + $0x98] sm:$0xff]
    %v987 = vld [vmem:[#allocation6 + $0xa0] sm:$0xff]
    %v988 = vld [vmem:[#allocation6 + $0xa8] sm:$0xff]
    %v989 = vld [vmem:[#allocation6 + $0xb0] sm:$0xff]
    %v990 = vld [vmem:[#allocation6 + $0xb8] sm:$0xff]
    %v991 = vld [vmem:[#allocation6 + $0xc0] sm:$0xff]
    %v992 = vld [vmem:[#allocation6 + $0xc8] sm:$0xff]
    %v993 = vld [vmem:[#allocation6 + $0xd0] sm:$0xff]
    %v994 = vld [vmem:[#allocation6 + $0xd8] sm:$0xff]
    %v995 = vld [vmem:[#allocation6 + $0xe0] sm:$0xff]
    %v996 = vld [vmem:[#allocation6 + $0xe8] sm:$0xff]
    %v997 = vld [vmem:[#allocation6 + $0xf0] sm:$0xff]
    %v998 = vld [vmem:[#allocation6 + $0xf8] sm:$0xff]
    %v999 = vld [vmem:[%s6] sm:$0x1]
    %v1001 = vlaneseq
    %v1002 = vshrl.u32 %v1001, 7
    %v1003 = vsub.s32 0, %v1002
    %v1004 = vrot.slane %v999, %v1003
    %1006 = vmatprep.subr.mxu0 0.0
    %1007 = vmatpush1.msra.mxu0 %v967
    %1008 = vmatprep.subr.mxu0 0.0
    %1009 = vmatpush1.msra.mxu0 %v968
    %1010 = vmatprep.subr.mxu0 0.0
    %1011 = vmatpush1.msra.mxu0 %v969
    %1012 = vmatprep.subr.mxu0 0.0
    %1013 = vmatpush1.msra.mxu0 %v970
    %1014 = vmatprep.subr.mxu0 0.0
    %1015 = vmatpush1.msra.mxu0 %v971
    %1016 = vmatprep.subr.mxu0 0.0
    %1017 = vmatpush1.msra.mxu0 %v972
    %1018 = vmatprep.subr.mxu0 0.0
    %1019 = vmatpush1.msra.mxu0 %v973
    %1020 = vmatprep.subr.mxu0 0.0
    %1021 = vmatpush1.msra.mxu0 %v974
    %1022 = vmatprep.subr.mxu0 0.0
    %1023 = vmatpush1.msra.mxu0 %v975
    %1024 = vmatprep.subr.mxu0 0.0
    %1025 = vmatpush1.msra.mxu0 %v976
    %1026 = vmatprep.subr.mxu0 0.0
    %1027 = vmatpush1.msra.mxu0 %v977
    %1028 = vmatprep.subr.mxu0 0.0
    %1029 = vmatpush1.msra.mxu0 %v978
    %1030 = vmatprep.subr.mxu0 0.0
    %1031 = vmatpush1.msra.mxu0 %v979
    %1032 = vmatprep.subr.mxu0 0.0
    %1033 = vmatpush1.msra.mxu0 %v980
    %1034 = vmatprep.subr.mxu0 0.0
    %1035 = vmatpush1.msra.mxu0 %v981
    %1036 = vmatprep.subr.mxu0 0.0
    %1037 = vmatpush1.msra.mxu0 %v982
    %1038 = vmatprep.subr.mxu0 0.0
    %1039 = vmatpush1.msra.mxu0 %v983
    %1040 = vmatprep.subr.mxu0 0.0
    %1041 = vmatpush1.msra.mxu0 %v984
    %1042 = vmatprep.subr.mxu0 0.0
    %1043 = vmatpush1.msra.mxu0 %v985
    %1044 = vmatprep.subr.mxu0 0.0
    %1045 = vmatpush1.msra.mxu0 %v986
    %1046 = vmatprep.subr.mxu0 0.0
    %1047 = vmatpush1.msra.mxu0 %v987
    %1048 = vmatprep.subr.mxu0 0.0
    %1049 = vmatpush1.msra.mxu0 %v988
    %1050 = vmatprep.subr.mxu0 0.0
    %1051 = vmatpush1.msra.mxu0 %v989
    %1052 = vmatprep.subr.mxu0 0.0
    %1053 = vmatpush1.msra.mxu0 %v990
    %1054 = vmatprep.subr.mxu0 0.0
    %1055 = vmatpush1.msra.mxu0 %v991
    %1056 = vmatprep.subr.mxu0 0.0
    %1057 = vmatpush1.msra.mxu0 %v992
    %1058 = vmatprep.subr.mxu0 0.0
    %1059 = vmatpush1.msra.mxu0 %v993
    %1060 = vmatprep.subr.mxu0 0.0
    %1061 = vmatpush1.msra.mxu0 %v994
    %1062 = vmatprep.subr.mxu0 0.0
    %1063 = vmatpush1.msra.mxu0 %v995
    %1064 = vmatprep.subr.mxu0 0.0
    %1065 = vmatpush1.msra.mxu0 %v996
    %1066 = vmatprep.subr.mxu0 0.0
    %1067 = vmatpush1.msra.mxu0 %v997
    %1068 = vmatprep.subr.mxu0 0.0
    %1069 = vmatpush1.msra.mxu0 %v998
    %1070 = vmatprep.mubr.f32.mxu0 %v960
    %1071 = vmatmul.mubr.f32.gmra.mrb[0].mxu0 %v959
    %v1072 = vpop.f32.mrb[0].mxu0
    %v1073 = vadd.f32 %v1004, %v1072
    %v1074 = vpop.f32.mrb[0].mxu0
    %1075 = vmatprep.mubr.f32.mxu0 %v962
    %1076 = vmatmul.mubr.f32.gmra.mrb[0].mxu0 %v961
    %v1077 = vpop.f32.mrb[0].mxu0
    %v1078 = vadd.f32 %v1004, %v1077
    %v1079 = vpop.f32.mrb[0].mxu0
    %1080 = vmatprep.mubr.f32.mxu0 %v964
    %1081 = vmatmul.mubr.f32.gmra.mrb[0].mxu0 %v963
    %v1082 = vpop.f32.mrb[0].mxu0
    %v1083 = vadd.f32 %v1004, %v1082
    %v1084 = vpop.f32.mrb[0].mxu0
    %1085 = vmatprep.mubr.f32.mxu0 %v966
    %1086 = vmatmul.mubr.f32.gmra.mrb[0].mxu0 %v965
    %v1087 = vpop.f32.mrb[0].mxu0
    %v1088 = vadd.f32 %v1004, %v1087
    %v1089 = vpop.f32.mrb[0].mxu0
    %1090 = vdwg.mxu0
    %1091 = vst [vmem:[%s7] sm:$0xff] %v1073
    %1092 = vst [vmem:[%s7 + $0x8] sm:$0xff] %v1078
    %1093 = vst [vmem:[%s7 + $0x10] sm:$0xff] %v1083
    %1094 = vst [vmem:[%s7 + $0x18] sm:$0xff] %v1088
    // Predicated region
    $region42: #{forward.1} parent=1 // pred_check
      _
    $region43: #{forward.1} parent=1 // pred_check_branch
      %1096 = sbr.rel (0) target = $region45
    $region44: #{forward.1} parent=1 // pred_region
      _
    $region45: #{forward.1} parent=1 // pred_fallthru
      _
    // Predicated region
    $region46: #{forward.1} parent=1 // pred_check
      _
    $region47: #{forward.1} parent=1 // pred_check_branch
      %1098 = sbr.rel (0) target = $region49
    $region48: #{forward.1} parent=1 // pred_region
      _
    $region49: #{forward.1} parent=1 // pred_fallthru
      _
    %1099 = vsyncpa [#allocation3], 1
    %1100 = vsyncpa [#allocation5], 1

</llo_original>
